<compile_context>
chip_gen: v5e
topology: v5e:2x2
jax: 0.10.0
libtpu: 0.0.40
codegen_flags: <defaults>
</compile_context>

<pallas_src>
import functools

import jax
import jax.numpy as jnp
from jax import lax
from jax.experimental import pallas as pl
from jax.experimental.pallas import tpu as pltpu

_LANE = 128
_SUBLANE_BF16 = 16


def _round_up(x, m):
    return ((x + m - 1) // m) * m


def relexnet_kernel(x_ref, wt_ref, b_ref, binit_ref, pred_ref, bout_ref,
                    *, batch_block, t_block, num_classes, c_pad):
    ti = pl.program_id(1)

    # Initialize the output-resident accumulator with B_init on the first chunk
    # of this batch block.  (Must stay *above* the += below.)
    @pl.when(ti == 0)
    def _():
        bout_ref[...] = binit_ref[...]

    # Fused chunk of timesteps: one big lane-dense MXU matmul per grid step.
    xb = x_ref[...]                                         # (bb, TB, vocab) bf16
    x2d = xb.reshape(batch_block * t_block, xb.shape[-1])   # (bb*TB, vocab)
    s = jnp.dot(x2d, wt_ref[...],
                preferred_element_type=jnp.float32)         # (bb*TB, c_pad) f32
    s = s + b_ref[...]                                      # bias broadcast (1, c_pad)
    s = jnp.clip(s, 0.0, 6.0)                               # relu6
    # No tail mask: zero-padded timesteps contribute exactly relu6(bias), which
    # the wrapper pre-subtracts from B_init (no per-chunk VALU mask work).
    s3 = s.reshape(batch_block, t_block, c_pad)
    bout_ref[...] += jnp.sum(s3, axis=1)                    # (bb, c_pad)

    # Finalize: softmax over the real classes (pad lanes masked out).
    @pl.when(ti == pl.num_programs(1) - 1)
    def _():
        b_fin = bout_ref[...]
        lane = lax.broadcasted_iota(jnp.int32, (batch_block, c_pad), 1)
        b_masked = jnp.where(lane < num_classes, b_fin, jnp.float32(-1e30))
        m = jnp.max(b_masked, axis=1, keepdims=True)
        e = jnp.exp(b_masked - m)                           # ~0 on pad lanes
        denom = jnp.sum(e, axis=1, keepdims=True)
        pred_ref[...] = (e * pl.reciprocal(denom, approx=True)
                         ).astype(pred_ref.dtype)


def _build_specs(batch_block, t_block, vocab, c_pad, single_buffer_resident):
    def resident(shape, index_map):
        if single_buffer_resident:
            # Grid-invariant operand: single buffer frees VMEM for the x chunk.
            return pl.BlockSpec(shape, index_map, pipeline_mode=pl.Buffered(1))
        return pl.BlockSpec(shape, index_map)

    in_specs = [
        pl.BlockSpec((batch_block, t_block, vocab),
                     lambda bi, ti: (bi, ti, 0)),            # x chunk (streamed)
        resident((vocab, c_pad), lambda bi, ti: (0, 0)),     # W^T (resident)
        resident((1, c_pad), lambda bi, ti: (0, 0)),         # bias (resident)
        pl.BlockSpec((batch_block, c_pad), lambda bi, ti: (bi, 0)),   # B_init
    ]
    out_specs = [
        pl.BlockSpec((batch_block, c_pad), lambda bi, ti: (bi, 0)),   # predict_y
        pl.BlockSpec((batch_block, c_pad), lambda bi, ti: (bi, 0)),   # B_layer acc
    ]
    return in_specs, out_specs


def _run(x_c, w_t, b_row, b_init, *, batch, batch_block, num_b_blocks,
         t_block, num_chunks, vocab, num_classes, c_pad, vmem_limit_bytes,
         cost_estimate, single_buffer_resident):
    kernel = functools.partial(
        relexnet_kernel, batch_block=batch_block, t_block=t_block,
        num_classes=num_classes, c_pad=c_pad)
    in_specs, out_specs = _build_specs(batch_block, t_block, vocab, c_pad,
                                       single_buffer_resident)
    grid_spec = pltpu.PrefetchScalarGridSpec(
        num_scalar_prefetch=0,
        grid=(num_b_blocks, num_chunks),
        in_specs=in_specs,
        out_specs=out_specs,
    )
    out = pl.pallas_call(
        kernel,
        out_shape=(
            jax.ShapeDtypeStruct((batch, c_pad), jnp.float32),
            jax.ShapeDtypeStruct((batch, c_pad), jnp.float32),
        ),
        grid_spec=grid_spec,
        compiler_params=pltpu.CompilerParams(
            dimension_semantics=("parallel", "arbitrary"),   # T chunks reduce
            vmem_limit_bytes=vmem_limit_bytes,
        ),
        cost_estimate=cost_estimate,
    )(x_c, w_t, b_row, b_init)
    # Block here so any lowering/runtime error is raised inside the caller's
    # try/except (enables the pipeline_mode fallback).
    return jax.block_until_ready(out)


def relexnet_forward(x, w, b, b_layer=None, *, t_block=None,
                     compute_dtype=jnp.bfloat16):
    """x: (batch, T, vocab); w: (num_classes, vocab); b: (num_classes,)."""
    batch, T, vocab = x.shape
    num_classes = w.shape[0]

    # Lane-dense class padding (multiple of 128) -> unmasked full-width stores.
    c_pad = _round_up(max(num_classes, _LANE), _LANE)

    # v7x second-TensorCore engagement: split batch into 2 "parallel" blocks
    # when each half stays 8-sublane aligned.  Harmless on 1-TC chips.
    num_b_blocks = 2 if (batch >= 16 and batch % 16 == 0) else 1
    batch_block = batch // num_b_blocks

    # ---- VMEM-budget-driven time-chunk size (generation aware). -------------
    try:
        vmem_cap = int(pltpu.get_tpu_info().vmem_capacity_bytes)
    except Exception:
        vmem_cap = 64 * 1024 * 1024          # conservative (v7x-sized) fallback
    vmem_limit_bytes = int(vmem_cap * 0.90)  # raise the 16/32 MiB scoped default
    vmem_budget = int(vmem_cap * 0.70)       # what our tiles may occupy

    vocab_lane = _round_up(vocab, _LANE)     # lane-padded x-tile footprint
    wt_vmem = _round_up(vocab, _SUBLANE_BF16) * c_pad * 2
    fixed_vmem = (2 * wt_vmem                                   # W^T (<=2 bufs)
                  + 2 * 8 * c_pad * 4                           # bias
                  + 2 * _round_up(batch_block, 8) * c_pad * 4   # B_init
                  + 4 * _round_up(batch_block, 8) * c_pad * 4   # 2 f32 outputs
                  + (2 << 20))                                  # compiler slack
    per_t_vmem = (2 * batch_block * vocab_lane * 2              # bf16 x, 2 bufs
                  + 2 * batch_block * c_pad * 4)                # f32 intermediates
    t_fit = (vmem_budget - fixed_vmem) // per_t_vmem
    t_fit = max(16, (t_fit // 16) * 16)
    t_fit = min(t_fit, 4096)

    if t_block is None:
        t_block = t_fit
    # Multiple of 16 (bf16 sublane packing), capped by VMEM fit and by T.
    t_block = max(16, (min(t_block, t_fit, _round_up(T, 16)) // 16) * 16)
    t_pad = _round_up(T, t_block)
    num_chunks = t_pad // t_block

    # ---- Operand preparation (bf16 stream, f32 accumulation). ---------------
    x_c = x.astype(compute_dtype)
    if t_pad != T:
        x_c = jnp.pad(x_c, ((0, 0), (0, t_pad - T), (0, 0)))

    w_t = jnp.zeros((vocab, c_pad), compute_dtype).at[:, :num_classes].set(
        jnp.asarray(w, compute_dtype).T)
    b_row = jnp.zeros((1, c_pad), jnp.float32).at[:, :num_classes].set(
        jnp.asarray(b, jnp.float32).reshape(1, num_classes))
    if b_layer is None:
        b_init = jnp.zeros((batch, c_pad), jnp.float32)
    else:
        b_init = jnp.zeros((batch, c_pad), jnp.float32).at[:, :num_classes].set(
            jnp.asarray(b_layer, jnp.float32))

    # Pre-compensate the zero-padded timesteps: each padded row adds exactly
    # relu6(bias) in f32, so subtract it from B_init instead of masking
    # per-chunk inside the kernel.
    if t_pad != T:
        b_init = b_init - (t_pad - T) * jnp.clip(b_row, 0.0, 6.0)

    cost = pl.CostEstimate(
        flops=int(2 * batch * t_pad * vocab * c_pad),
        transcendentals=int(batch * c_pad),
        bytes_accessed=int(batch * t_pad * vocab * 2 + vocab * c_pad * 2
                           + 3 * batch * c_pad * 4),
    )

    run = functools.partial(
        _run, batch=batch, batch_block=batch_block, num_b_blocks=num_b_blocks,
        t_block=t_block, num_chunks=num_chunks, vocab=vocab,
        num_classes=num_classes, c_pad=c_pad,
        vmem_limit_bytes=vmem_limit_bytes, cost_estimate=cost)

    try:
        # Preferred: single-buffered grid-invariant operands.
        pred_pad, bout_pad = run(x_c, w_t, b_row, b_init,
                                 single_buffer_resident=True)
    except Exception:
        # Fallback if this jax/Mosaic build rejects pipeline_mode=pl.Buffered(1).
        pred_pad, bout_pad = run(x_c, w_t, b_row, b_init,
                                 single_buffer_resident=False)

    return pred_pad[:, :num_classes], bout_pad[:, :num_classes]


def relexnet_reference(x, w, b, b_layer=None, compute_dtype=jnp.bfloat16):
    """Pure-JAX reference mirroring the PyTorch loop (inputs rounded like the
    kernel's bf16 operands, accumulation in f32)."""
    batch, T, _ = x.shape
    num_classes = w.shape[0]
    xr = x.astype(compute_dtype).astype(jnp.float32)
    wr = w.astype(compute_dtype).astype(jnp.float32)
    if b_layer is None:
        B = jnp.zeros((batch, num_classes), dtype=jnp.float32)
    else:
        B = b_layer.astype(jnp.float32)
    for t in range(T):
        l = xr[:, t, :] @ wr.T + b
        l = jnp.clip(l, 0.0, 6.0)
        B = B + l
    pred = jax.nn.softmax(B, axis=1)
    return pred, B


if __name__ == "__main__":
    # Small deterministic shapes consistent with the module:
    # vocabulary_size=32, len_seq (T)=8, num_classes=4, batch=2.
    batch, T, vocab, num_classes = 2, 8, 32, 4

    key = jax.random.PRNGKey(0)
    kx, kw, kb, kinit = jax.random.split(key, 4)

    x = jax.random.normal(kx, (batch, T, vocab), dtype=jnp.float32)

    # Deterministic Linear(vocab -> num_classes) init (PyTorch-style uniform bound).
    bound = 1.0 / (vocab ** 0.5)
    w = jax.random.uniform(kw, (num_classes, vocab), jnp.float32, -bound, bound)
    b = jax.random.uniform(kb, (num_classes,), jnp.float32, -bound, bound)
    b_init = jax.random.normal(kinit, (batch, num_classes), dtype=jnp.float32)

    pred, b_out = relexnet_forward(x, w, b, b_init)
    pred = jax.block_until_ready(pred)
    b_out = jax.block_until_ready(b_out)

    pred_ref, b_ref = relexnet_reference(x, w, b, b_init)
    assert jnp.allclose(b_out, b_ref, atol=1e-3, rtol=1e-3), "B_layer mismatch"
    assert jnp.allclose(pred, pred_ref, atol=1e-3, rtol=1e-3), "predict_y mismatch"

    print("KERNEL_OK")
</pallas_src>

<mosaic_0001>
module attributes {stable_mosaic.version = 11 : i64} {
  func.func @relexnet_kernel(%arg0: i32, %arg1: i32, %arg2: memref<2x16x32xbf16, #tpu.memory_space<vmem>>, %arg3: memref<32x128xbf16, #tpu.memory_space<vmem>>, %arg4: memref<1x128xf32, #tpu.memory_space<vmem>>, %arg5: memref<2x128xf32, #tpu.memory_space<vmem>>, %arg6: memref<2x128xf32, #tpu.memory_space<vmem>>, %arg7: memref<2x128xf32, #tpu.memory_space<vmem>>) attributes {dimension_semantics = [#tpu.dimension_semantics<parallel>, #tpu.dimension_semantics<arbitrary>], iteration_bounds = array<i64: 1, 1>, scalar_prefetch = 0 : i64, scratch_operands = 0 : i64, tpu.core_type = #tpu.core_type<tc>, window_params = [{transform_indices = @transform_0, window_bounds = array<i64: 2, 16, 32>}, {pipeline_mode = #tpu.pipeline_mode<synchronous>, transform_indices = @transform_1, window_bounds = array<i64: 32, 128>}, {pipeline_mode = #tpu.pipeline_mode<synchronous>, transform_indices = @transform_2, window_bounds = array<i64: 1, 128>}, {transform_indices = @transform_3, window_bounds = array<i64: 2, 128>}, {transform_indices = @transform_4, window_bounds = array<i64: 2, 128>}, {transform_indices = @transform_5, window_bounds = array<i64: 2, 128>}]} {
    %c0_i32 = arith.constant 0 : i32
    %0 = arith.cmpi eq, %arg1, %c0_i32 : i32
    %1 = arith.extui %0 : i1 to i32
    %c0_i32_0 = arith.constant 0 : i32
    %2 = arith.cmpi ne, %1, %c0_i32_0 : i32
    scf.if %2 {
      %c0_16 = arith.constant 0 : index
      %c0_17 = arith.constant 0 : index
      %22 = vector.load %arg5[%c0_16, %c0_17] : memref<2x128xf32, #tpu.memory_space<vmem>>, vector<2x128xf32>
      %c0_18 = arith.constant 0 : index
      %c0_19 = arith.constant 0 : index
      %23 = vector.load %arg7[%c0_18, %c0_19] : memref<2x128xf32, #tpu.memory_space<vmem>>, vector<2x128xf32>
      tpu.vector_store %arg7[%c0_18, %c0_19], %22 {strides = array<i32>} : memref<2x128xf32, #tpu.memory_space<vmem>>, vector<2x128xf32>,
    } else {
    }
    %c0 = arith.constant 0 : index
    %c0_1 = arith.constant 0 : index
    %c0_2 = arith.constant 0 : index
    %3 = vector.load %arg2[%c0, %c0_1, %c0_2] : memref<2x16x32xbf16, #tpu.memory_space<vmem>>, vector<2x16x32xbf16>
    %4 = vector.shape_cast %3 : vector<2x16x32xbf16> to vector<32x32xbf16>
    %c0_3 = arith.constant 0 : index
    %c0_4 = arith.constant 0 : index
    %5 = vector.load %arg3[%c0_3, %c0_4] : memref<32x128xbf16, #tpu.memory_space<vmem>>, vector<32x128xbf16>
    %cst = arith.constant dense<0.000000e+00> : vector<32x128xf32>
    %6 = tpu.matmul %4, %5, %cst {dimension_numbers = #tpu.dot_dimension_numbers<[1], [0], [0], [1], [0, 0, 1, 1], [], []>} : vector<32x32xbf16>, vector<32x128xbf16>, vector<32x128xf32> -> vector<32x128xf32>
    %c0_5 = arith.constant 0 : index
    %c0_6 = arith.constant 0 : index
    %7 = vector.load %arg4[%c0_5, %c0_6] : memref<1x128xf32, #tpu.memory_space<vmem>>, vector<1x128xf32>
    %8 = vector.broadcast %7 : vector<1x128xf32> to vector<32x128xf32>
    %9 = arith.addf %6, %8 : vector<32x128xf32>
    %cst_7 = arith.constant 0.000000e+00 : f32
    %cst_8 = arith.constant 6.000000e+00 : f32
    %10 = vector.broadcast %cst_7 : f32 to vector<32x128xf32>
    %11 = arith.maximumf %10, %9 : vector<32x128xf32>
    %12 = vector.broadcast %cst_8 : f32 to vector<32x128xf32>
    %13 = arith.minimumf %12, %11 : vector<32x128xf32>
    %14 = vector.shape_cast %13 : vector<32x128xf32> to vector<2x16x128xf32>
    %c0_9 = arith.constant 0 : index
    %c0_10 = arith.constant 0 : index
    %15 = vector.load %arg7[%c0_9, %c0_10] : memref<2x128xf32, #tpu.memory_space<vmem>>, vector<2x128xf32>
    %cst_11 = arith.constant dense<0.000000e+00> : vector<2x128xf32>
    %16 = vector.multi_reduction <add>, %14, %cst_11 [1] : vector<2x16x128xf32> to vector<2x128xf32>
    %17 = arith.addf %15, %16 : vector<2x128xf32>
    %c0_12 = arith.constant 0 : index
    %c0_13 = arith.constant 0 : index
    %18 = vector.load %arg7[%c0_12, %c0_13] : memref<2x128xf32, #tpu.memory_space<vmem>>, vector<2x128xf32>
    tpu.vector_store %arg7[%c0_12, %c0_13], %17 {strides = array<i32>} : memref<2x128xf32, #tpu.memory_space<vmem>>, vector<2x128xf32>,
    %c0_i32_14 = arith.constant 0 : i32
    %19 = arith.cmpi eq, %arg1, %c0_i32_14 : i32
    %20 = arith.extui %19 : i1 to i32
    %c0_i32_15 = arith.constant 0 : i32
    %21 = arith.cmpi ne, %20, %c0_i32_15 : i32
    scf.if %21 {
      %c0_16 = arith.constant 0 : index
      %c0_17 = arith.constant 0 : index
      %22 = vector.load %arg7[%c0_16, %c0_17] : memref<2x128xf32, #tpu.memory_space<vmem>>, vector<2x128xf32>
      %23 = tpu.iota {dimensions = array<i32: 1>} : vector<2x128xi32>
      %c4_i32 = arith.constant 4 : i32
      %24 = vector.broadcast %c4_i32 : i32 to vector<2x128xi32>
      %25 = arith.cmpi slt, %23, %24 : vector<2x128xi32>
      %cst_18 = arith.constant -1.000000e+30 : f32
      %26 = vector.broadcast %cst_18 : f32 to vector<2x128xf32>
      %27 = arith.select %25, %22, %26 : vector<2x128xi1>, vector<2x128xf32>
      %cst_19 = arith.constant dense<0xFF800000> : vector<2xf32>
      %28 = vector.multi_reduction <maximumf>, %27, %cst_19 [1] : vector<2x128xf32> to vector<2xf32>
      %29 = vector.shape_cast %28 : vector<2xf32> to vector<2x1xf32>
      %30 = vector.broadcast %29 : vector<2x1xf32> to vector<2x128xf32>
      %31 = arith.subf %27, %30 : vector<2x128xf32>
      %32 = math.exp %31 : vector<2x128xf32>
      %cst_20 = arith.constant dense<0.000000e+00> : vector<2xf32>
      %33 = vector.multi_reduction <add>, %32, %cst_20 [1] : vector<2x128xf32> to vector<2xf32>
      %34 = vector.shape_cast %33 : vector<2xf32> to vector<2x1xf32>
      %35 = tpu.reciprocal %34 {approx = true} : vector<2x1xf32> -> vector<2x1xf32>
      %36 = vector.broadcast %35 : vector<2x1xf32> to vector<2x128xf32>
      %37 = arith.mulf %32, %36 : vector<2x128xf32>
      %c0_21 = arith.constant 0 : index
      %c0_22 = arith.constant 0 : index
      %38 = vector.load %arg6[%c0_21, %c0_22] : memref<2x128xf32, #tpu.memory_space<vmem>>, vector<2x128xf32>
      tpu.vector_store %arg6[%c0_21, %c0_22], %37 {strides = array<i32>} : memref<2x128xf32, #tpu.memory_space<vmem>>, vector<2x128xf32>,
    } else {
    }
    return
  }
  func.func @transform_0(%arg0: i32, %arg1: i32) -> (i32, i32, i32) {
    %c0_i32 = arith.constant 0 : i32
    %c0_i32_0 = arith.constant 0 : i32
    return %arg0, %arg1, %c0_i32 : i32, i32, i32
  }
  func.func @transform_1(%arg0: i32, %arg1: i32) -> (i32, i32) {
    %c0_i32 = arith.constant 0 : i32
    %c0_i32_0 = arith.constant 0 : i32
    %c0_i32_1 = arith.constant 0 : i32
    return %c0_i32, %c0_i32_0 : i32, i32
  }
  func.func @transform_2(%arg0: i32, %arg1: i32) -> (i32, i32) {
    %c0_i32 = arith.constant 0 : i32
    %c0_i32_0 = arith.constant 0 : i32
    %c0_i32_1 = arith.constant 0 : i32
    return %c0_i32, %c0_i32_0 : i32, i32
  }
  func.func @transform_3(%arg0: i32, %arg1: i32) -> (i32, i32) {
    %c0_i32 = arith.constant 0 : i32
    %c0_i32_0 = arith.constant 0 : i32
    return %arg0, %c0_i32 : i32, i32
  }
  func.func @transform_4(%arg0: i32, %arg1: i32) -> (i32, i32) {
    %c0_i32 = arith.constant 0 : i32
    %c0_i32_0 = arith.constant 0 : i32
    return %arg0, %c0_i32 : i32, i32
  }
  func.func @transform_5(%arg0: i32, %arg1: i32) -> (i32, i32) {
    %c0_i32 = arith.constant 0 : i32
    %c0_i32_0 = arith.constant 0 : i32
    return %arg0, %c0_i32 : i32, i32
  }
}

module attributes {stable_mosaic.version = 11 : i64} {
  func.func @relexnet_kernel(%arg0: i32, %arg1: i32, %arg2: memref<2x16x32xbf16, #tpu.memory_space<vmem>>, %arg3: memref<32x128xbf16, #tpu.memory_space<vmem>>, %arg4: memref<1x128xf32, #tpu.memory_space<vmem>>, %arg5: memref<2x128xf32, #tpu.memory_space<vmem>>, %arg6: memref<2x128xf32, #tpu.memory_space<vmem>>, %arg7: memref<2x128xf32, #tpu.memory_space<vmem>>) attributes {dimension_semantics = [#tpu.dimension_semantics<parallel>, #tpu.dimension_semantics<arbitrary>], iteration_bounds = array<i64: 1, 1>, scalar_prefetch = 0 : i64, scratch_operands = 0 : i64, tpu.core_type = #tpu.core_type<tc>, window_params = [{transform_indices = @transform_0, window_bounds = array<i64: 2, 16, 32>}, {pipeline_mode = #tpu.pipeline_mode<synchronous>, transform_indices = @transform_1, window_bounds = array<i64: 32, 128>}, {pipeline_mode = #tpu.pipeline_mode<synchronous>, transform_indices = @transform_2, window_bounds = array<i64: 1, 128>}, {transform_indices = @transform_3, window_bounds = array<i64: 2, 128>}, {transform_indices = @transform_4, window_bounds = array<i64: 2, 128>}, {transform_indices = @transform_5, window_bounds = array<i64: 2, 128>}]} {
    %c0_i32 = arith.constant 0 : i32
    %0 = arith.cmpi eq, %arg1, %c0_i32 : i32
    %1 = arith.extui %0 : i1 to i32
    %c0_i32_0 = arith.constant 0 : i32
    %2 = arith.cmpi ne, %1, %c0_i32_0 : i32
    scf.if %2 {
      %c0_16 = arith.constant 0 : index
      %c0_17 = arith.constant 0 : index
      %22 = vector.load %arg5[%c0_16, %c0_17] : memref<2x128xf32, #tpu.memory_space<vmem>>, vector<2x128xf32>
      %c0_18 = arith.constant 0 : index
      %c0_19 = arith.constant 0 : index
      %23 = vector.load %arg7[%c0_18, %c0_19] : memref<2x128xf32, #tpu.memory_space<vmem>>, vector<2x128xf32>
      tpu.vector_store %arg7[%c0_18, %c0_19], %22 {strides = array<i32>} : memref<2x128xf32, #tpu.memory_space<vmem>>, vector<2x128xf32>,
    } else {
    }
    %c0 = arith.constant 0 : index
    %c0_1 = arith.constant 0 : index
    %c0_2 = arith.constant 0 : index
    %3 = vector.load %arg2[%c0, %c0_1, %c0_2] : memref<2x16x32xbf16, #tpu.memory_space<vmem>>, vector<2x16x32xbf16>
    %4 = vector.shape_cast %3 : vector<2x16x32xbf16> to vector<32x32xbf16>
    %c0_3 = arith.constant 0 : index
    %c0_4 = arith.constant 0 : index
    %5 = vector.load %arg3[%c0_3, %c0_4] : memref<32x128xbf16, #tpu.memory_space<vmem>>, vector<32x128xbf16>
    %cst = arith.constant dense<0.000000e+00> : vector<32x128xf32>
    %6 = tpu.matmul %4, %5, %cst {dimension_numbers = #tpu.dot_dimension_numbers<[1], [0], [0], [1], [0, 0, 1, 1], [], []>} : vector<32x32xbf16>, vector<32x128xbf16>, vector<32x128xf32> -> vector<32x128xf32>
    %c0_5 = arith.constant 0 : index
    %c0_6 = arith.constant 0 : index
    %7 = vector.load %arg4[%c0_5, %c0_6] : memref<1x128xf32, #tpu.memory_space<vmem>>, vector<1x128xf32>
    %8 = vector.broadcast %7 : vector<1x128xf32> to vector<32x128xf32>
    %9 = arith.addf %6, %8 : vector<32x128xf32>
    %cst_7 = arith.constant 0.000000e+00 : f32
    %cst_8 = arith.constant 6.000000e+00 : f32
    %10 = vector.broadcast %cst_7 : f32 to vector<32x128xf32>
    %11 = arith.maximumf %10, %9 : vector<32x128xf32>
    %12 = vector.broadcast %cst_8 : f32 to vector<32x128xf32>
    %13 = arith.minimumf %12, %11 : vector<32x128xf32>
    %14 = vector.shape_cast %13 : vector<32x128xf32> to vector<2x16x128xf32>
    %c0_9 = arith.constant 0 : index
    %c0_10 = arith.constant 0 : index
    %15 = vector.load %arg7[%c0_9, %c0_10] : memref<2x128xf32, #tpu.memory_space<vmem>>, vector<2x128xf32>
    %cst_11 = arith.constant dense<0.000000e+00> : vector<2x128xf32>
    %16 = vector.multi_reduction <add>, %14, %cst_11 [1] : vector<2x16x128xf32> to vector<2x128xf32>
    %17 = arith.addf %15, %16 : vector<2x128xf32>
    %c0_12 = arith.constant 0 : index
    %c0_13 = arith.constant 0 : index
    %18 = vector.load %arg7[%c0_12, %c0_13] : memref<2x128xf32, #tpu.memory_space<vmem>>, vector<2x128xf32>
    tpu.vector_store %arg7[%c0_12, %c0_13], %17 {strides = array<i32>} : memref<2x128xf32, #tpu.memory_space<vmem>>, vector<2x128xf32>,
    %c0_i32_14 = arith.constant 0 : i32
    %19 = arith.cmpi eq, %arg1, %c0_i32_14 : i32
    %20 = arith.extui %19 : i1 to i32
    %c0_i32_15 = arith.constant 0 : i32
    %21 = arith.cmpi ne, %20, %c0_i32_15 : i32
    scf.if %21 {
      %c0_16 = arith.constant 0 : index
      %c0_17 = arith.constant 0 : index
      %22 = vector.load %arg7[%c0_16, %c0_17] : memref<2x128xf32, #tpu.memory_space<vmem>>, vector<2x128xf32>
      %23 = tpu.iota {dimensions = array<i32: 1>} : vector<2x128xi32>
      %c4_i32 = arith.constant 4 : i32
      %24 = vector.broadcast %c4_i32 : i32 to vector<2x128xi32>
      %25 = arith.cmpi slt, %23, %24 : vector<2x128xi32>
      %cst_18 = arith.constant -1.000000e+30 : f32
      %26 = vector.broadcast %cst_18 : f32 to vector<2x128xf32>
      %27 = arith.select %25, %22, %26 : vector<2x128xi1>, vector<2x128xf32>
      %cst_19 = arith.constant dense<0xFF800000> : vector<2xf32>
      %28 = vector.multi_reduction <maximumf>, %27, %cst_19 [1] : vector<2x128xf32> to vector<2xf32>
      %29 = vector.shape_cast %28 : vector<2xf32> to vector<2x1xf32>
      %30 = vector.broadcast %29 : vector<2x1xf32> to vector<2x128xf32>
      %31 = arith.subf %27, %30 : vector<2x128xf32>
      %32 = math.exp %31 : vector<2x128xf32>
      %cst_20 = arith.constant dense<0.000000e+00> : vector<2xf32>
      %33 = vector.multi_reduction <add>, %32, %cst_20 [1] : vector<2x128xf32> to vector<2xf32>
      %34 = vector.shape_cast %33 : vector<2xf32> to vector<2x1xf32>
      %35 = tpu.reciprocal %34 {approx = true} : vector<2x1xf32> -> vector<2x1xf32>
      %36 = vector.broadcast %35 : vector<2x1xf32> to vector<2x128xf32>
      %37 = arith.mulf %32, %36 : vector<2x128xf32>
      %c0_21 = arith.constant 0 : index
      %c0_22 = arith.constant 0 : index
      %38 = vector.load %arg6[%c0_21, %c0_22] : memref<2x128xf32, #tpu.memory_space<vmem>>, vector<2x128xf32>
      tpu.vector_store %arg6[%c0_21, %c0_22], %37 {strides = array<i32>} : memref<2x128xf32, #tpu.memory_space<vmem>>, vector<2x128xf32>,
    } else {
    }
    return
  }
  func.func @transform_0(%arg0: i32, %arg1: i32) -> (i32, i32, i32) {
    %c0_i32 = arith.constant 0 : i32
    %c0_i32_0 = arith.constant 0 : i32
    return %arg0, %arg1, %c0_i32 : i32, i32, i32
  }
  func.func @transform_1(%arg0: i32, %arg1: i32) -> (i32, i32) {
    %c0_i32 = arith.constant 0 : i32
    %c0_i32_0 = arith.constant 0 : i32
    %c0_i32_1 = arith.constant 0 : i32
    return %c0_i32, %c0_i32_0 : i32, i32
  }
  func.func @transform_2(%arg0: i32, %arg1: i32) -> (i32, i32) {
    %c0_i32 = arith.constant 0 : i32
    %c0_i32_0 = arith.constant 0 : i32
    %c0_i32_1 = arith.constant 0 : i32
    return %c0_i32, %c0_i32_0 : i32, i32
  }
  func.func @transform_3(%arg0: i32, %arg1: i32) -> (i32, i32) {
    %c0_i32 = arith.constant 0 : i32
    %c0_i32_0 = arith.constant 0 : i32
    return %arg0, %c0_i32 : i32, i32
  }
  func.func @transform_4(%arg0: i32, %arg1: i32) -> (i32, i32) {
    %c0_i32 = arith.constant 0 : i32
    %c0_i32_0 = arith.constant 0 : i32
    return %arg0, %c0_i32 : i32, i32
  }
  func.func @transform_5(%arg0: i32, %arg1: i32) -> (i32, i32) {
    %c0_i32 = arith.constant 0 : i32
    %c0_i32_0 = arith.constant 0 : i32
    return %arg0, %c0_i32 : i32, i32
  }
}

</mosaic_0001>

<llo_original>
// kernel: tpu_custom_call.1
$region0: #{tpu_custom_call.1}
  #allocation0 [shape = 'u32[]', space=smem, size = 0x4, offset = 0x4, fixed_abs, tag = 'smem constant byte address 0x4 - core index']
  #allocation1 [shape = 'u32[72,128]{1,0:T(1,128)}', space=vmem, size = 0x9000, scoped, tag = 'internal scratch']
  %s0 = inlined_call_operand.hbm [shape: bf16[2,16,32], index: 0, kind: input, shape index: {}]
  %s1 = inlined_call_operand.hbm [shape: bf16[32,128], index: 1, kind: input, shape index: {}]
  %s2 = inlined_call_operand.hbm [shape: f32[1,128], index: 2, kind: input, shape index: {}]
  %s3 = inlined_call_operand.vmem [shape: f32[2,128], index: 3, kind: input, shape index: {}]
  %s4 = inlined_call_operand.hbm [shape: f32[2,128], index: 4, kind: output, shape index: {0}]
  %s5 = inlined_call_operand.hbm [shape: f32[2,128], index: 5, kind: output, shape index: {1}]
  %6 = xla_tuple %s4, %s5
  %s7 = sld [smem:[#allocation0]]
  $region54: #{tpu_custom_call.1} parent=0
    _
  %s9 = ssub.s32 1, %s7
  %s10 = scalar_select 0, %s9, %s7
  $region1: #{tpu_custom_call.1} parent=0
    #allocation2 [shape = 'u8[8192]{0}', space=vmem, size = 0x2000, scoped, tag = 'input window, operand 0, single buffered']
    #allocation3 [shape = 's32[1]{0}', space=sflag, size = 0x4, scoped, tag = 'scoped memory for tpu_custom_call.1']
    #allocation4 [shape = 's32[1]{0}', space=sflag, size = 0x4, scoped, tag = 'scoped memory for tpu_custom_call.1']
    #allocation5 [shape = 'u8[8192]{0}', space=vmem, size = 0x2000, scoped, tag = 'input window, operand 1, single buffered']
    #allocation6 [shape = 's32[1]{0}', space=sflag, size = 0x4, scoped, tag = 'scoped memory for tpu_custom_call.1']
    #allocation7 [shape = 'u8[512]{0}', space=vmem, size = 0x400, scoped, tag = 'input window, operand 2, single buffered']
    #allocation8 [shape = 'u8[1024]{0}', space=vmem, size = 0x400, scoped, tag = 'output window, operand 0, single buffered']
    #allocation9 [shape = 'u8[1024]{0}', space=vmem, size = 0x400, scoped, tag = 'output window, operand 1, single buffered']
    #allocation10 [shape = 's32[1]{0}', space=sflag, size = 0x4, scoped, tag = 'scoped memory for tpu_custom_call.1']
    %11 = vsyncpa [#allocation3], 0
    %12 = vsyncpa [#allocation6], 0
    %13 = vsyncpa [#allocation4], 0
    %14 = vsyncpa [#allocation10], 0
    // Predicated region
    $region2: #{tpu_custom_call.1} parent=1 // pred_check
      _
    $region3: #{tpu_custom_call.1} parent=1 // pred_check_branch
      %16 = sbr.rel (0) target = $region5
    $region4: #{tpu_custom_call.1} parent=1 // pred_region
      %18 = vsyncadd [#allocation3], 0
      %s19 = sshll.u32 %s0, 4
      %s20 = int_to_ptr.hbm [resolvable:$true] %s19
      %s21 = sshll.u32 [#allocation2], 4
      %s22 = int_to_ptr.vmem [resolvable:$true] %s21
      %27 = dma.hbm_to_vmem [thread:$0]  %s20, 256, %s22, [#allocation3], 64, 64, 4
    $region5: #{tpu_custom_call.1} parent=1 // pred_fallthru
      _
    // Predicated region
    $region6: #{tpu_custom_call.1} parent=1 // pred_check
      _
    $region7: #{tpu_custom_call.1} parent=1 // pred_check_branch
      %29 = sbr.rel (0) target = $region9
    $region8: #{tpu_custom_call.1} parent=1 // pred_region
      %31 = vsyncadd [#allocation6], 0
      %s32 = sshll.u32 %s1, 4
      %s33 = int_to_ptr.hbm [resolvable:$true] %s32
      %s34 = sshll.u32 [#allocation5], 4
      %s35 = int_to_ptr.vmem [resolvable:$true] %s34
      %40 = dma.hbm_to_vmem [thread:$0]  %s33, 256, %s35, [#allocation6], 64, 64, 4
    $region9: #{tpu_custom_call.1} parent=1 // pred_fallthru
      _
    // Predicated region
    $region10: #{tpu_custom_call.1} parent=1 // pred_check
      _
    $region11: #{tpu_custom_call.1} parent=1 // pred_check_branch
      %42 = sbr.rel (0) target = $region13
    $region12: #{tpu_custom_call.1} parent=1 // pred_region
      %44 = vsyncadd [#allocation6], 0
      %s46 = sshll.u32 %s2, 4
      %s47 = int_to_ptr.hbm [resolvable:$true] %s46
      %s48 = sshll.u32 [#allocation7], 4
      %s49 = int_to_ptr.vmem [resolvable:$true] %s48
      %51 = dma.hbm_to_vmem [thread:$0]  %s47, 16, %s49, [#allocation6]
    $region13: #{tpu_custom_call.1} parent=1 // pred_fallthru
      _
    // Predicated region
    $region14: #{tpu_custom_call.1} parent=1 // pred_check
      _
    $region15: #{tpu_custom_call.1} parent=1 // pred_check_branch
      %53 = sbr.rel (0) target = $region17
    $region16: #{tpu_custom_call.1} parent=1 // pred_region
      _
    $region17: #{tpu_custom_call.1} parent=1 // pred_fallthru
      _
    // Predicated region
    $region18: #{tpu_custom_call.1} parent=1 // pred_check
      _
    $region19: #{tpu_custom_call.1} parent=1 // pred_check_branch
      %55 = sbr.rel (0) target = $region21
    $region20: #{tpu_custom_call.1} parent=1 // pred_region
      %57 = dma.done [#allocation3], 256
    $region21: #{tpu_custom_call.1} parent=1 // pred_fallthru
      _
    // Predicated region
    $region22: #{tpu_custom_call.1} parent=1 // pred_check
      _
    $region23: #{tpu_custom_call.1} parent=1 // pred_check_branch
      %59 = sbr.rel (0) target = $region25
    $region24: #{tpu_custom_call.1} parent=1 // pred_region
      %61 = dma.done [#allocation6], 256
    $region25: #{tpu_custom_call.1} parent=1 // pred_fallthru
      _
    // Predicated region
    $region26: #{tpu_custom_call.1} parent=1 // pred_check
      _
    $region27: #{tpu_custom_call.1} parent=1 // pred_check_branch
      %63 = sbr.rel (0) target = $region29
    $region28: #{tpu_custom_call.1} parent=1 // pred_region
      %65 = dma.done [#allocation6], 16
    $region29: #{tpu_custom_call.1} parent=1 // pred_fallthru
      _
    %p67 = scmp.eq.s32.totalorder 0, 0
    // Predicated region
    $region30: #{tpu_custom_call.1} parent=1 // pred_check
      %p68 = pneg %p67
    $region31: #{tpu_custom_call.1} parent=1 // pred_check_branch
      %70 = sbr.rel (%p68) target = $region33
    $region32: #{tpu_custom_call.1} parent=1 // pred_region
      %v71 = vld [vmem:[%s3] sm:$0x3]
      %72 = vst [vmem:[#allocation9] sm:$0x3] %v71
    $region33: #{tpu_custom_call.1} parent=1 // pred_fallthru
      _
    %v73 = vld [vmem:[#allocation2] sm:$0xf]
    %v74 = vld [vmem:[#allocation2 + $0x4] sm:$0xf]
    %v75 = vld [vmem:[#allocation2 + $0x8] sm:$0xf]
    %v76 = vld [vmem:[#allocation2 + $0xc] sm:$0xf]
    %v77 = vld [vmem:[#allocation5] sm:$0xf]
    %v78 = vld [vmem:[#allocation5 + $0x4] sm:$0xf]
    %v79 = vld [vmem:[#allocation5 + $0x8] sm:$0xf]
    %v80 = vld [vmem:[#allocation5 + $0xc] sm:$0xf]
    %v81 = vld [vmem:[#allocation7] sm:$0x1]
    %v83 = vperm.slane %v81, 0
    %v89 = vunpack.c.l.b16 %v73
    %v90 = vunpack.c.l.b16 %v74
    %v91 = vunpack.c.l.b16 %v75
    %v92 = vunpack.c.l.b16 %v76
    %v93 = vpack.c.b16 %v90, %v89
    %v94 = vpack.c.b16 %v92, %v91
    %v99 = vunpack.c.l.b16 %v77
    %v100 = vunpack.c.l.b16 %v78
    %v101 = vunpack.c.l.b16 %v79
    %v102 = vunpack.c.l.b16 %v80
    %v103 = vpack.c.b16 %v100, %v99
    %v104 = vpack.c.b16 %v102, %v101
    %vm107 = vcmask 261120
    %v109 = vsel %vm107, %v93, 0
    %v112 = vsel %vm107, %v94, 0
    %114 = vmatpush.bf16.msra.mxu0 0
    %115 = vmatpush.bf16.msra.mxu0 0
    %116 = vmatpush.bf16.msra.mxu0 0
    %117 = vmatpush.bf16.msra.mxu0 0
    %118 = vmatpush.bf16.msra.mxu0 0
    %119 = vmatpush.bf16.msra.mxu0 0
    %120 = vmatpush.bf16.msra.mxu0 %v104
    %121 = vmatpush.bf16.msra.mxu0 %v103
    %122 = vmatmul.bf16.gmra.mxu0 %v109
    %v123 = vpop.f32.mrf.mxu0
    %v124 = vadd.f32 %v83, %v123
    %v125 = vpop.f32.mrf.mxu0
    %v126 = vadd.f32 %v83, %v125
    %127 = vmatmul.bf16.gmra.mxu0 %v112
    %v128 = vpop.f32.mrf.mxu0
    %v129 = vadd.f32 %v83, %v128
    %v130 = vpop.f32.mrf.mxu0
    %v131 = vadd.f32 %v83, %v130
    %132 = vdwg.mxu0
    %v133 = vmax.f32 %v124, 0.0
    %v134 = vmax.f32 %v126, 0.0
    %v135 = vmax.f32 %v129, 0.0
    %v136 = vmax.f32 %v131, 0.0
    %v137 = vmin.f32 %v133, 6.0
    %v138 = vmin.f32 %v134, 6.0
    %v139 = vmin.f32 %v135, 6.0
    %v140 = vmin.f32 %v136, 6.0
    %v141 = vld [vmem:[#allocation9] sm:$0x3]
    %v142 = vadd.f32 %v137, %v138
    %v143 = vrot.slane %v142, 4
    %v144 = vadd.f32 %v142, %v143
    %v145 = vrot.slane %v144, 2
    %v146 = vadd.f32 %v144, %v145
    %v147 = vrot.slane %v146, 1
    %v148 = vadd.f32 %v146, %v147
    %v149 = vadd.f32 %v139, %v140
    %v150 = vrot.slane %v149, 4
    %v151 = vadd.f32 %v149, %v150
    %v152 = vrot.slane %v151, 2
    %v153 = vadd.f32 %v151, %v152
    %v154 = vrot.slane %v153, 1
    %v155 = vadd.f32 %v153, %v154
    %vm158 = vcmask 1041409
    %v159 = vsel %vm158, %v155, %v148
    %v161 = vadd.f32 %v141, %v159
    %162 = vst [vmem:[#allocation9] sm:$0x3] %v161
    // Predicated region
    $region34: #{tpu_custom_call.1} parent=1 // pred_check
      %p163 = pneg %p67
    $region35: #{tpu_custom_call.1} parent=1 // pred_check_branch
      %165 = sbr.rel (%p163) target = $region37
    $region36: #{tpu_custom_call.1} parent=1 // pred_region
      %v166 = vld [vmem:[#allocation9] sm:$0x3]
      %v167 = vlaneseq
      %v168 = vand.u32 %v167, 127
      %vm169 = vcmp.lt.s32.totalorder %v168, 4
      %v170 = vsel %vm169, %v166, -1e+30
      %vm171 = vcmask 1041408
      %v172 = vsel %vm171, %v170, -inf
      %173 = vmax.xlane.f32.xlu0 %v172
      %v174 = vpop.xlane.xlu0 %173
      %v175 = vsub.f32 %v170, %v174
      %v176 = vmul.f32 %v175, 1.442695
      %v177 = vpow.pop %v176
      %v178 = vsel %vm171, %v177, 0.0
      %179 = vadd.xlane.f32.xlu0 %v178
      %v180 = vpop.xlane.xlu0 %179
      %v181 = vrcp.pop %v180
      %v182 = vmul.f32 %v177, %v181
      %183 = vst [vmem:[#allocation8] sm:$0x3] %v182
    $region37: #{tpu_custom_call.1} parent=1 // pred_fallthru
      _
    // Predicated region
    $region38: #{tpu_custom_call.1} parent=1 // pred_check
      _
    $region39: #{tpu_custom_call.1} parent=1 // pred_check_branch
      %185 = sbr.rel (0) target = $region41
    $region40: #{tpu_custom_call.1} parent=1 // pred_region
      %187 = vsyncadd [#allocation4], 0
      %s189 = sshll.u32 [#allocation8], 4
      %s190 = int_to_ptr.vmem [resolvable:$true] %s189
      %s191 = sshll.u32 %s4, 4
      %s192 = int_to_ptr.hbm [resolvable:$true] %s191
      %194 = dma.vmem_to_hbm [thread:$0]  %s190, 32, %s192, [#allocation4]
    $region41: #{tpu_custom_call.1} parent=1 // pred_fallthru
      _
    // Predicated region
    $region42: #{tpu_custom_call.1} parent=1 // pred_check
      _
    $region43: #{tpu_custom_call.1} parent=1 // pred_check_branch
      %196 = sbr.rel (0) target = $region45
    $region44: #{tpu_custom_call.1} parent=1 // pred_region
      %198 = vsyncadd [#allocation10], 0
      %s200 = sshll.u32 [#allocation9], 4
      %s201 = int_to_ptr.vmem [resolvable:$true] %s200
      %s202 = sshll.u32 %s5, 4
      %s203 = int_to_ptr.hbm [resolvable:$true] %s202
      %205 = dma.vmem_to_hbm [thread:$0]  %s201, 32, %s203, [#allocation10]
    $region45: #{tpu_custom_call.1} parent=1 // pred_fallthru
      _
    // Predicated region
    $region46: #{tpu_custom_call.1} parent=1 // pred_check
      _
    $region47: #{tpu_custom_call.1} parent=1 // pred_check_branch
      %207 = sbr.rel (0) target = $region49
    $region48: #{tpu_custom_call.1} parent=1 // pred_region
      %209 = dma.done [#allocation4], 32
    $region49: #{tpu_custom_call.1} parent=1 // pred_fallthru
      _
    // Predicated region
    $region50: #{tpu_custom_call.1} parent=1 // pred_check
      _
    $region51: #{tpu_custom_call.1} parent=1 // pred_check_branch
      %211 = sbr.rel (0) target = $region53
    $region52: #{tpu_custom_call.1} parent=1 // pred_region
      %213 = dma.done [#allocation10], 32
    $region53: #{tpu_custom_call.1} parent=1 // pred_fallthru
      _
    %214 = vsyncpa [#allocation3], 1
    %215 = vsyncpa [#allocation6], 1
    %216 = vsyncpa [#allocation4], 1
    %217 = vsyncpa [#allocation10], 1

// kernel: tpu_custom_call.1
$region0: #{tpu_custom_call.1}
  #allocation0 [shape = 'u32[]', space=smem, size = 0x4, offset = 0x4, fixed_abs, tag = 'smem constant byte address 0x4 - core index']
  #allocation1 [shape = 'u32[72,128]{1,0:T(1,128)}', space=vmem, size = 0x9000, scoped, tag = 'internal scratch']
  %s0 = inlined_call_operand.hbm [shape: bf16[2,16,32], index: 0, kind: input, shape index: {}]
  %s1 = inlined_call_operand.hbm [shape: bf16[32,128], index: 1, kind: input, shape index: {}]
  %s2 = inlined_call_operand.hbm [shape: f32[1,128], index: 2, kind: input, shape index: {}]
  %s3 = inlined_call_operand.vmem [shape: f32[2,128], index: 3, kind: input, shape index: {}]
  %s4 = inlined_call_operand.hbm [shape: f32[2,128], index: 4, kind: output, shape index: {0}]
  %s5 = inlined_call_operand.hbm [shape: f32[2,128], index: 5, kind: output, shape index: {1}]
  %6 = xla_tuple %s4, %s5
  %s7 = sld [smem:[#allocation0]]
  $region54: #{tpu_custom_call.1} parent=0
    _
  %s9 = ssub.s32 1, %s7
  %s10 = scalar_select 0, %s9, %s7
  $region1: #{tpu_custom_call.1} parent=0
    #allocation2 [shape = 'u8[8192]{0}', space=vmem, size = 0x2000, scoped, tag = 'input window, operand 0, single buffered']
    #allocation3 [shape = 's32[1]{0}', space=sflag, size = 0x4, scoped, tag = 'scoped memory for tpu_custom_call.1']
    #allocation4 [shape = 's32[1]{0}', space=sflag, size = 0x4, scoped, tag = 'scoped memory for tpu_custom_call.1']
    #allocation5 [shape = 'u8[8192]{0}', space=vmem, size = 0x2000, scoped, tag = 'input window, operand 1, single buffered']
    #allocation6 [shape = 's32[1]{0}', space=sflag, size = 0x4, scoped, tag = 'scoped memory for tpu_custom_call.1']
    #allocation7 [shape = 'u8[512]{0}', space=vmem, size = 0x400, scoped, tag = 'input window, operand 2, single buffered']
    #allocation8 [shape = 'u8[1024]{0}', space=vmem, size = 0x400, scoped, tag = 'output window, operand 0, single buffered']
    #allocation9 [shape = 'u8[1024]{0}', space=vmem, size = 0x400, scoped, tag = 'output window, operand 1, single buffered']
    #allocation10 [shape = 's32[1]{0}', space=sflag, size = 0x4, scoped, tag = 'scoped memory for tpu_custom_call.1']
    %11 = vsyncpa [#allocation3], 0
    %12 = vsyncpa [#allocation6], 0
    %13 = vsyncpa [#allocation4], 0
    %14 = vsyncpa [#allocation10], 0
    // Predicated region
    $region2: #{tpu_custom_call.1} parent=1 // pred_check
      _
    $region3: #{tpu_custom_call.1} parent=1 // pred_check_branch
      %16 = sbr.rel (0) target = $region5
    $region4: #{tpu_custom_call.1} parent=1 // pred_region
      %18 = vsyncadd [#allocation3], 0
      %s19 = sshll.u32 %s0, 4
      %s20 = int_to_ptr.hbm [resolvable:$true] %s19
      %s21 = sshll.u32 [#allocation2], 4
      %s22 = int_to_ptr.vmem [resolvable:$true] %s21
      %27 = dma.hbm_to_vmem [thread:$0]  %s20, 256, %s22, [#allocation3], 64, 64, 4
    $region5: #{tpu_custom_call.1} parent=1 // pred_fallthru
      _
    // Predicated region
    $region6: #{tpu_custom_call.1} parent=1 // pred_check
      _
    $region7: #{tpu_custom_call.1} parent=1 // pred_check_branch
      %29 = sbr.rel (0) target = $region9
    $region8: #{tpu_custom_call.1} parent=1 // pred_region
      %31 = vsyncadd [#allocation6], 0
      %s32 = sshll.u32 %s1, 4
      %s33 = int_to_ptr.hbm [resolvable:$true] %s32
      %s34 = sshll.u32 [#allocation5], 4
      %s35 = int_to_ptr.vmem [resolvable:$true] %s34
      %40 = dma.hbm_to_vmem [thread:$0]  %s33, 256, %s35, [#allocation6], 64, 64, 4
    $region9: #{tpu_custom_call.1} parent=1 // pred_fallthru
      _
    // Predicated region
    $region10: #{tpu_custom_call.1} parent=1 // pred_check
      _
    $region11: #{tpu_custom_call.1} parent=1 // pred_check_branch
      %42 = sbr.rel (0) target = $region13
    $region12: #{tpu_custom_call.1} parent=1 // pred_region
      %44 = vsyncadd [#allocation6], 0
      %s46 = sshll.u32 %s2, 4
      %s47 = int_to_ptr.hbm [resolvable:$true] %s46
      %s48 = sshll.u32 [#allocation7], 4
      %s49 = int_to_ptr.vmem [resolvable:$true] %s48
      %51 = dma.hbm_to_vmem [thread:$0]  %s47, 16, %s49, [#allocation6]
    $region13: #{tpu_custom_call.1} parent=1 // pred_fallthru
      _
    // Predicated region
    $region14: #{tpu_custom_call.1} parent=1 // pred_check
      _
    $region15: #{tpu_custom_call.1} parent=1 // pred_check_branch
      %53 = sbr.rel (0) target = $region17
    $region16: #{tpu_custom_call.1} parent=1 // pred_region
      _
    $region17: #{tpu_custom_call.1} parent=1 // pred_fallthru
      _
    // Predicated region
    $region18: #{tpu_custom_call.1} parent=1 // pred_check
      _
    $region19: #{tpu_custom_call.1} parent=1 // pred_check_branch
      %55 = sbr.rel (0) target = $region21
    $region20: #{tpu_custom_call.1} parent=1 // pred_region
      %57 = dma.done [#allocation3], 256
    $region21: #{tpu_custom_call.1} parent=1 // pred_fallthru
      _
    // Predicated region
    $region22: #{tpu_custom_call.1} parent=1 // pred_check
      _
    $region23: #{tpu_custom_call.1} parent=1 // pred_check_branch
      %59 = sbr.rel (0) target = $region25
    $region24: #{tpu_custom_call.1} parent=1 // pred_region
      %61 = dma.done [#allocation6], 256
    $region25: #{tpu_custom_call.1} parent=1 // pred_fallthru
      _
    // Predicated region
    $region26: #{tpu_custom_call.1} parent=1 // pred_check
      _
    $region27: #{tpu_custom_call.1} parent=1 // pred_check_branch
      %63 = sbr.rel (0) target = $region29
    $region28: #{tpu_custom_call.1} parent=1 // pred_region
      %65 = dma.done [#allocation6], 16
    $region29: #{tpu_custom_call.1} parent=1 // pred_fallthru
      _
    %p67 = scmp.eq.s32.totalorder 0, 0
    // Predicated region
    $region30: #{tpu_custom_call.1} parent=1 // pred_check
      %p68 = pneg %p67
    $region31: #{tpu_custom_call.1} parent=1 // pred_check_branch
      %70 = sbr.rel (%p68) target = $region33
    $region32: #{tpu_custom_call.1} parent=1 // pred_region
      %v71 = vld [vmem:[%s3] sm:$0x3]
      %72 = vst [vmem:[#allocation9] sm:$0x3] %v71
    $region33: #{tpu_custom_call.1} parent=1 // pred_fallthru
      _
    %v73 = vld [vmem:[#allocation2] sm:$0xf]
    %v74 = vld [vmem:[#allocation2 + $0x4] sm:$0xf]
    %v75 = vld [vmem:[#allocation2 + $0x8] sm:$0xf]
    %v76 = vld [vmem:[#allocation2 + $0xc] sm:$0xf]
    %v77 = vld [vmem:[#allocation5] sm:$0xf]
    %v78 = vld [vmem:[#allocation5 + $0x4] sm:$0xf]
    %v79 = vld [vmem:[#allocation5 + $0x8] sm:$0xf]
    %v80 = vld [vmem:[#allocation5 + $0xc] sm:$0xf]
    %v81 = vld [vmem:[#allocation7] sm:$0x1]
    %v83 = vperm.slane %v81, 0
    %v89 = vunpack.c.l.b16 %v73
    %v90 = vunpack.c.l.b16 %v74
    %v91 = vunpack.c.l.b16 %v75
    %v92 = vunpack.c.l.b16 %v76
    %v93 = vpack.c.b16 %v90, %v89
    %v94 = vpack.c.b16 %v92, %v91
    %v99 = vunpack.c.l.b16 %v77
    %v100 = vunpack.c.l.b16 %v78
    %v101 = vunpack.c.l.b16 %v79
    %v102 = vunpack.c.l.b16 %v80
    %v103 = vpack.c.b16 %v100, %v99
    %v104 = vpack.c.b16 %v102, %v101
    %vm107 = vcmask 261120
    %v109 = vsel %vm107, %v93, 0
    %v112 = vsel %vm107, %v94, 0
    %114 = vmatpush.bf16.msra.mxu0 0
    %115 = vmatpush.bf16.msra.mxu0 0
    %116 = vmatpush.bf16.msra.mxu0 0
    %117 = vmatpush.bf16.msra.mxu0 0
    %118 = vmatpush.bf16.msra.mxu0 0
    %119 = vmatpush.bf16.msra.mxu0 0
    %120 = vmatpush.bf16.msra.mxu0 %v104
    %121 = vmatpush.bf16.msra.mxu0 %v103
    %122 = vmatmul.bf16.gmra.mxu0 %v109
    %v123 = vpop.f32.mrf.mxu0
    %v124 = vadd.f32 %v83, %v123
    %v125 = vpop.f32.mrf.mxu0
    %v126 = vadd.f32 %v83, %v125
    %127 = vmatmul.bf16.gmra.mxu0 %v112
    %v128 = vpop.f32.mrf.mxu0
    %v129 = vadd.f32 %v83, %v128
    %v130 = vpop.f32.mrf.mxu0
    %v131 = vadd.f32 %v83, %v130
    %132 = vdwg.mxu0
    %v133 = vmax.f32 %v124, 0.0
    %v134 = vmax.f32 %v126, 0.0
    %v135 = vmax.f32 %v129, 0.0
    %v136 = vmax.f32 %v131, 0.0
    %v137 = vmin.f32 %v133, 6.0
    %v138 = vmin.f32 %v134, 6.0
    %v139 = vmin.f32 %v135, 6.0
    %v140 = vmin.f32 %v136, 6.0
    %v141 = vld [vmem:[#allocation9] sm:$0x3]
    %v142 = vadd.f32 %v137, %v138
    %v143 = vrot.slane %v142, 4
    %v144 = vadd.f32 %v142, %v143
    %v145 = vrot.slane %v144, 2
    %v146 = vadd.f32 %v144, %v145
    %v147 = vrot.slane %v146, 1
    %v148 = vadd.f32 %v146, %v147
    %v149 = vadd.f32 %v139, %v140
    %v150 = vrot.slane %v149, 4
    %v151 = vadd.f32 %v149, %v150
    %v152 = vrot.slane %v151, 2
    %v153 = vadd.f32 %v151, %v152
    %v154 = vrot.slane %v153, 1
    %v155 = vadd.f32 %v153, %v154
    %vm158 = vcmask 1041409
    %v159 = vsel %vm158, %v155, %v148
    %v161 = vadd.f32 %v141, %v159
    %162 = vst [vmem:[#allocation9] sm:$0x3] %v161
    // Predicated region
    $region34: #{tpu_custom_call.1} parent=1 // pred_check
      %p163 = pneg %p67
    $region35: #{tpu_custom_call.1} parent=1 // pred_check_branch
      %165 = sbr.rel (%p163) target = $region37
    $region36: #{tpu_custom_call.1} parent=1 // pred_region
      %v166 = vld [vmem:[#allocation9] sm:$0x3]
      %v167 = vlaneseq
      %v168 = vand.u32 %v167, 127
      %vm169 = vcmp.lt.s32.totalorder %v168, 4
      %v170 = vsel %vm169, %v166, -1e+30
      %vm171 = vcmask 1041408
      %v172 = vsel %vm171, %v170, -inf
      %173 = vmax.xlane.f32.xlu0 %v172
      %v174 = vpop.xlane.xlu0 %173
      %v175 = vsub.f32 %v170, %v174
      %v176 = vmul.f32 %v175, 1.442695
      %v177 = vpow.pop %v176
      %v178 = vsel %vm171, %v177, 0.0
      %179 = vadd.xlane.f32.xlu0 %v178
      %v180 = vpop.xlane.xlu0 %179
      %v181 = vrcp.pop %v180
      %v182 = vmul.f32 %v177, %v181
      %183 = vst [vmem:[#allocation8] sm:$0x3] %v182
    $region37: #{tpu_custom_call.1} parent=1 // pred_fallthru
      _
    // Predicated region
    $region38: #{tpu_custom_call.1} parent=1 // pred_check
      _
    $region39: #{tpu_custom_call.1} parent=1 // pred_check_branch
      %185 = sbr.rel (0) target = $region41
    $region40: #{tpu_custom_call.1} parent=1 // pred_region
      %187 = vsyncadd [#allocation4], 0
      %s189 = sshll.u32 [#allocation8], 4
      %s190 = int_to_ptr.vmem [resolvable:$true] %s189
      %s191 = sshll.u32 %s4, 4
      %s192 = int_to_ptr.hbm [resolvable:$true] %s191
      %194 = dma.vmem_to_hbm [thread:$0]  %s190, 32, %s192, [#allocation4]
    $region41: #{tpu_custom_call.1} parent=1 // pred_fallthru
      _
    // Predicated region
    $region42: #{tpu_custom_call.1} parent=1 // pred_check
      _
    $region43: #{tpu_custom_call.1} parent=1 // pred_check_branch
      %196 = sbr.rel (0) target = $region45
    $region44: #{tpu_custom_call.1} parent=1 // pred_region
      %198 = vsyncadd [#allocation10], 0
      %s200 = sshll.u32 [#allocation9], 4
      %s201 = int_to_ptr.vmem [resolvable:$true] %s200
      %s202 = sshll.u32 %s5, 4
      %s203 = int_to_ptr.hbm [resolvable:$true] %s202
      %205 = dma.vmem_to_hbm [thread:$0]  %s201, 32, %s203, [#allocation10]
    $region45: #{tpu_custom_call.1} parent=1 // pred_fallthru
      _
    // Predicated region
    $region46: #{tpu_custom_call.1} parent=1 // pred_check
      _
    $region47: #{tpu_custom_call.1} parent=1 // pred_check_branch
      %207 = sbr.rel (0) target = $region49
    $region48: #{tpu_custom_call.1} parent=1 // pred_region
      %209 = dma.done [#allocation4], 32
    $region49: #{tpu_custom_call.1} parent=1 // pred_fallthru
      _
    // Predicated region
    $region50: #{tpu_custom_call.1} parent=1 // pred_check
      _
    $region51: #{tpu_custom_call.1} parent=1 // pred_check_branch
      %211 = sbr.rel (0) target = $region53
    $region52: #{tpu_custom_call.1} parent=1 // pred_region
      %213 = dma.done [#allocation10], 32
    $region53: #{tpu_custom_call.1} parent=1 // pred_fallthru
      _
    %214 = vsyncpa [#allocation3], 1
    %215 = vsyncpa [#allocation6], 1
    %216 = vsyncpa [#allocation4], 1
    %217 = vsyncpa [#allocation10], 1

</llo_original>
